<compile_context>
chip_gen: v6e
topology: v6e:2x2x1
jax: 0.10.0
libtpu: 0.0.40
codegen_flags: <defaults>
</compile_context>

<pallas_src>
import functools

import jax
import jax.numpy as jnp
from jax.experimental import pallas as pl
from jax.experimental.pallas import tpu as pltpu


def vae_kernel(
    z_dim,        # python int (closure)
    x_ref,        # [Bt, D]   flattened input block (f32)
    w1_ref,       # [D, H]    encoder layer 1 (bf16)
    b1_ref,       # [1, H]    (f32)
    wh_ref,       # [H, 2Z]   fused mu|log_var head (bf16)
    bh_ref,       # [1, 2Z]   (f32)
    wd1_ref,      # [Z, H]    decoder layer 1 (bf16)
    bd1_ref,      # [1, H]    (f32)
    wd2_ref,      # [H, D]    decoder layer 2 (bf16)
    bd2_ref,      # [1, D]    (f32)
    eps_ref,      # [Bt, Z]   reparameterization noise (f32)
    recon_ref,    # [Bt, D]   out: reconstruction (flattened)
    stats_ref,    # [Bt, 2Z]  out: packed [mu | log_var]
):
    # ---------------- encoder (bf16 MXU inputs, f32 accumulation) ----------
    x = x_ref[...].astype(jnp.bfloat16)
    h = jnp.dot(x, w1_ref[...], preferred_element_type=jnp.float32) + b1_ref[...]
    h = jnp.maximum(h, 0.0)

    # fused mu | log_var head: one [H, 2Z] dot instead of two [H, Z] dots
    stats = (jnp.dot(h.astype(jnp.bfloat16), wh_ref[...],
                     preferred_element_type=jnp.float32) + bh_ref[...])
    mu = stats[:, :z_dim]
    log_var = stats[:, z_dim:]

    # ---------------- sampling: eps * exp(0.5*log_var) + mu (f32) ----------
    std = jnp.exp(0.5 * log_var)
    z = eps_ref[...] * std + mu

    # ---------------- decoder ----------------------------------------------
    hd = (jnp.dot(z.astype(jnp.bfloat16), wd1_ref[...],
                  preferred_element_type=jnp.float32) + bd1_ref[...])
    hd = jnp.maximum(hd, 0.0)
    logits = (jnp.dot(hd.astype(jnp.bfloat16), wd2_ref[...],
                      preferred_element_type=jnp.float32) + bd2_ref[...])

    recon_ref[...] = jax.nn.sigmoid(logits).astype(recon_ref.dtype)
    stats_ref[...] = stats.astype(stats_ref.dtype)


def vae_forward(x_nchw, params, eps, *, b_tile=256):
    """x_nchw: [B, C, H, W] f32.  Returns (recon [B,C,H,W], mu [B,Z], log_var [B,Z])."""
    B, C, H, W = x_nchw.shape
    D = C * H * W
    Hh = params["w1"].shape[1]
    Z = params["wmu"].shape[1]

    x_flat = x_nchw.reshape(B, D)

    # Pack the two heads once in the wrapper; cast weights to bf16 (MXU rate,
    # half the resident VMEM / weight DMA). Biases stay f32 (added post-acc).
    w1 = params["w1"].astype(jnp.bfloat16)
    w_heads = jnp.concatenate([params["wmu"], params["wlv"]], axis=1).astype(jnp.bfloat16)
    b_heads = jnp.concatenate([params["bmu"], params["blv"]], axis=1)
    wd1 = params["wd1"].astype(jnp.bfloat16)
    wd2 = params["wd2"].astype(jnp.bfloat16)
    b1, bd1, bd2 = params["b1"], params["bd1"], params["bd2"]

    # Batch tile: full batch when small, otherwise 256 rows (fits v7x's 64 MiB
    # VMEM comfortably at D=1024 with double-buffered f32 x/recon blocks).
    bt = B if B <= b_tile else b_tile
    grid = (pl.cdiv(B, bt),)

    def batched(shape):   # activation blocks: tiled along batch
        return pl.BlockSpec((bt, shape[1]), lambda i: (i, 0))

    def resident(shape):  # weights/biases: same block every step -> stay in VMEM
        return pl.BlockSpec(shape, lambda i: (0, 0))

    # TODO(synk): for very large D, add a K/N reduction grid axis with an f32
    # VMEM accumulator instead of keeping w1/wd2 fully resident.
    recon_flat, stats = pl.pallas_call(
        functools.partial(vae_kernel, Z),
        out_shape=(
            jax.ShapeDtypeStruct((B, D), jnp.float32),
            jax.ShapeDtypeStruct((B, 2 * Z), jnp.float32),
        ),
        grid=grid,
        in_specs=[
            batched((B, D)),        # x
            resident((D, Hh)),      # w1
            resident((1, Hh)),      # b1
            resident((Hh, 2 * Z)),  # w_heads
            resident((1, 2 * Z)),   # b_heads
            resident((Z, Hh)),      # wd1
            resident((1, Hh)),      # bd1
            resident((Hh, D)),      # wd2
            resident((1, D)),       # bd2
            batched((B, Z)),        # eps
        ],
        out_specs=(
            batched((B, D)),        # recon
            batched((B, 2 * Z)),    # packed [mu | log_var]
        ),
        compiler_params=pltpu.CompilerParams(
            dimension_semantics=("parallel",),   # megacore split on v7x
        ),
    )(x_flat, w1, b1, w_heads, b_heads, wd1, bd1, wd2, bd2, eps)

    mu = stats[:, :Z]
    log_var = stats[:, Z:]
    return recon_flat.reshape(B, C, H, W), mu, log_var


def init_params(key, D, H, Z):
    """Deterministic PyTorch-Linear-style init (uniform in +-1/sqrt(fan_in))."""
    ks = jax.random.split(key, 10)

    def lin(kw, kb, fan_in, fan_out):
        bound = 1.0 / jnp.sqrt(jnp.float32(fan_in))
        w = jax.random.uniform(kw, (fan_in, fan_out), jnp.float32, -bound, bound)
        b = jax.random.uniform(kb, (1, fan_out), jnp.float32, -bound, bound)
        return w, b

    w1, b1 = lin(ks[0], ks[1], D, H)
    wmu, bmu = lin(ks[2], ks[3], H, Z)
    wlv, blv = lin(ks[4], ks[5], H, Z)
    wd1, bd1 = lin(ks[6], ks[7], Z, H)
    wd2, bd2 = lin(ks[8], ks[9], H, D)
    return dict(w1=w1, b1=b1, wmu=wmu, bmu=bmu, wlv=wlv, blv=blv,
                wd1=wd1, bd1=bd1, wd2=wd2, bd2=bd2)


if __name__ == "__main__":
    B, C, Himg, Wimg = 2, 4, 16, 16
    D = C * Himg * Wimg          # 1024
    Hhid = 32                    # encoder/decoder hidden width
    Z = 8                        # latent dim

    key = jax.random.PRNGKey(0)
    k_x, k_eps, k_params = jax.random.split(key, 3)

    x = jax.random.normal(k_x, (B, C, Himg, Wimg), jnp.float32)
    eps = jax.random.normal(k_eps, (B, Z), jnp.float32)  # torch.randn_like(std) analog
    params = init_params(k_params, D, Hhid, Z)

    recon, mu, log_var = jax.jit(vae_forward)(x, params, eps)
    jax.block_until_ready((recon, mu, log_var))

    assert recon.shape == x.shape
    assert mu.shape == (B, Z) and log_var.shape == (B, Z)

    # Pure-JAX reference with the same bf16 MXU-input / f32-accumulation policy.
    def ref(x, p, eps):
        bf = jnp.bfloat16
        xf = x.reshape(B, D).astype(bf)
        h = jnp.maximum(
            jnp.dot(xf, p["w1"].astype(bf), preferred_element_type=jnp.float32) + p["b1"], 0.0)
        wh = jnp.concatenate([p["wmu"], p["wlv"]], axis=1).astype(bf)
        bh = jnp.concatenate([p["bmu"], p["blv"]], axis=1)
        stats = jnp.dot(h.astype(bf), wh, preferred_element_type=jnp.float32) + bh
        mu_r, lv_r = stats[:, :Z], stats[:, Z:]
        z = eps * jnp.exp(0.5 * lv_r) + mu_r
        hd = jnp.maximum(
            jnp.dot(z.astype(bf), p["wd1"].astype(bf), preferred_element_type=jnp.float32) + p["bd1"], 0.0)
        logits = jnp.dot(hd.astype(bf), p["wd2"].astype(bf), preferred_element_type=jnp.float32) + p["bd2"]
        rec = jax.nn.sigmoid(logits).reshape(B, C, Himg, Wimg)
        return rec, mu_r, lv_r

    r_ref, mu_ref_v, lv_ref_v = ref(x, params, eps)
    assert jnp.allclose(recon, r_ref, atol=5e-3), float(jnp.max(jnp.abs(recon - r_ref)))
    assert jnp.allclose(mu, mu_ref_v, atol=5e-3), float(jnp.max(jnp.abs(mu - mu_ref_v)))
    assert jnp.allclose(log_var, lv_ref_v, atol=5e-3), float(jnp.max(jnp.abs(log_var - lv_ref_v)))

    print("KERNEL_OK")
</pallas_src>

<mosaic_0001>
module attributes {stable_mosaic.version = 11 : i64} {
  func.func @vae_kernel(%arg0: i32, %arg1: memref<2x1024xf32, #tpu.memory_space<vmem>>, %arg2: memref<1024x32xbf16, #tpu.memory_space<vmem>>, %arg3: memref<1x32xf32, #tpu.memory_space<vmem>>, %arg4: memref<32x16xbf16, #tpu.memory_space<vmem>>, %arg5: memref<1x16xf32, #tpu.memory_space<vmem>>, %arg6: memref<8x32xbf16, #tpu.memory_space<vmem>>, %arg7: memref<1x32xf32, #tpu.memory_space<vmem>>, %arg8: memref<32x1024xbf16, #tpu.memory_space<vmem>>, %arg9: memref<1x1024xf32, #tpu.memory_space<vmem>>, %arg10: memref<2x8xf32, #tpu.memory_space<vmem>>, %arg11: memref<2x1024xf32, #tpu.memory_space<vmem>>, %arg12: memref<2x16xf32, #tpu.memory_space<vmem>>) attributes {dimension_semantics = [#tpu.dimension_semantics<parallel>], iteration_bounds = array<i64: 1>, scalar_prefetch = 0 : i64, scratch_operands = 0 : i64, tpu.core_type = #tpu.core_type<tc>, window_params = [{transform_indices = @transform_0, window_bounds = array<i64: 2, 1024>}, {pipeline_mode = #tpu.pipeline_mode<synchronous>, transform_indices = @transform_1, window_bounds = array<i64: 1024, 32>}, {pipeline_mode = #tpu.pipeline_mode<synchronous>, transform_indices = @transform_2, window_bounds = array<i64: 1, 32>}, {pipeline_mode = #tpu.pipeline_mode<synchronous>, transform_indices = @transform_3, window_bounds = array<i64: 32, 16>}, {pipeline_mode = #tpu.pipeline_mode<synchronous>, transform_indices = @transform_4, window_bounds = array<i64: 1, 16>}, {pipeline_mode = #tpu.pipeline_mode<synchronous>, transform_indices = @transform_5, window_bounds = array<i64: 8, 32>}, {pipeline_mode = #tpu.pipeline_mode<synchronous>, transform_indices = @transform_6, window_bounds = array<i64: 1, 32>}, {pipeline_mode = #tpu.pipeline_mode<synchronous>, transform_indices = @transform_7, window_bounds = array<i64: 32, 1024>}, {pipeline_mode = #tpu.pipeline_mode<synchronous>, transform_indices = @transform_8, window_bounds = array<i64: 1, 1024>}, {transform_indices = @transform_9, window_bounds = array<i64: 2, 8>}, {transform_indices = @transform_10, window_bounds = array<i64: 2, 1024>}, {transform_indices = @transform_11, window_bounds = array<i64: 2, 16>}]} {
    %c0 = arith.constant 0 : index
    %c0_0 = arith.constant 0 : index
    %0 = vector.load %arg1[%c0, %c0_0] : memref<2x1024xf32, #tpu.memory_space<vmem>>, vector<2x1024xf32>
    %1 = arith.truncf %0 : vector<2x1024xf32> to vector<2x1024xbf16>
    %c0_1 = arith.constant 0 : index
    %c0_2 = arith.constant 0 : index
    %2 = vector.load %arg2[%c0_1, %c0_2] : memref<1024x32xbf16, #tpu.memory_space<vmem>>, vector<1024x32xbf16>
    %cst = arith.constant dense<0.000000e+00> : vector<2x32xf32>
    %3 = tpu.matmul %1, %2, %cst {dimension_numbers = #tpu.dot_dimension_numbers<[1], [0], [0], [1], [0, 0, 1, 1], [], []>} : vector<2x1024xbf16>, vector<1024x32xbf16>, vector<2x32xf32> -> vector<2x32xf32>
    %c0_3 = arith.constant 0 : index
    %c0_4 = arith.constant 0 : index
    %4 = vector.load %arg3[%c0_3, %c0_4] : memref<1x32xf32, #tpu.memory_space<vmem>>, vector<1x32xf32>
    %5 = vector.broadcast %4 : vector<1x32xf32> to vector<2x32xf32>
    %6 = arith.addf %3, %5 : vector<2x32xf32>
    %cst_5 = arith.constant 0.000000e+00 : f32
    %7 = vector.broadcast %cst_5 : f32 to vector<2x32xf32>
    %8 = arith.maximumf %6, %7 : vector<2x32xf32>
    %9 = arith.truncf %8 : vector<2x32xf32> to vector<2x32xbf16>
    %c0_6 = arith.constant 0 : index
    %c0_7 = arith.constant 0 : index
    %10 = vector.load %arg4[%c0_6, %c0_7] : memref<32x16xbf16, #tpu.memory_space<vmem>>, vector<32x16xbf16>
    %cst_8 = arith.constant dense<0.000000e+00> : vector<2x16xf32>
    %11 = tpu.matmul %9, %10, %cst_8 {dimension_numbers = #tpu.dot_dimension_numbers<[1], [0], [0], [1], [0, 0, 1, 1], [], []>} : vector<2x32xbf16>, vector<32x16xbf16>, vector<2x16xf32> -> vector<2x16xf32>
    %c0_9 = arith.constant 0 : index
    %c0_10 = arith.constant 0 : index
    %12 = vector.load %arg5[%c0_9, %c0_10] : memref<1x16xf32, #tpu.memory_space<vmem>>, vector<1x16xf32>
    %13 = vector.broadcast %12 : vector<1x16xf32> to vector<2x16xf32>
    %14 = arith.addf %11, %13 : vector<2x16xf32>
    %15 = vector.extract_strided_slice %14 {offsets = [0, 0], sizes = [2, 8], strides = [1, 1]} : vector<2x16xf32> to vector<2x8xf32>
    %16 = vector.extract_strided_slice %14 {offsets = [0, 8], sizes = [2, 8], strides = [1, 1]} : vector<2x16xf32> to vector<2x8xf32>
    %cst_11 = arith.constant 5.000000e-01 : f32
    %17 = vector.broadcast %cst_11 : f32 to vector<2x8xf32>
    %18 = arith.mulf %17, %16 : vector<2x8xf32>
    %19 = math.exp %18 : vector<2x8xf32>
    %c0_12 = arith.constant 0 : index
    %c0_13 = arith.constant 0 : index
    %20 = vector.load %arg10[%c0_12, %c0_13] : memref<2x8xf32, #tpu.memory_space<vmem>>, vector<2x8xf32>
    %21 = arith.mulf %20, %19 : vector<2x8xf32>
    %22 = arith.addf %21, %15 : vector<2x8xf32>
    %23 = arith.truncf %22 : vector<2x8xf32> to vector<2x8xbf16>
    %c0_14 = arith.constant 0 : index
    %c0_15 = arith.constant 0 : index
    %24 = vector.load %arg6[%c0_14, %c0_15] : memref<8x32xbf16, #tpu.memory_space<vmem>>, vector<8x32xbf16>
    %cst_16 = arith.constant dense<0.000000e+00> : vector<2x32xf32>
    %25 = tpu.matmul %23, %24, %cst_16 {dimension_numbers = #tpu.dot_dimension_numbers<[1], [0], [0], [1], [0, 0, 1, 1], [], []>} : vector<2x8xbf16>, vector<8x32xbf16>, vector<2x32xf32> -> vector<2x32xf32>
    %c0_17 = arith.constant 0 : index
    %c0_18 = arith.constant 0 : index
    %26 = vector.load %arg7[%c0_17, %c0_18] : memref<1x32xf32, #tpu.memory_space<vmem>>, vector<1x32xf32>
    %27 = vector.broadcast %26 : vector<1x32xf32> to vector<2x32xf32>
    %28 = arith.addf %25, %27 : vector<2x32xf32>
    %cst_19 = arith.constant 0.000000e+00 : f32
    %29 = vector.broadcast %cst_19 : f32 to vector<2x32xf32>
    %30 = arith.maximumf %28, %29 : vector<2x32xf32>
    %31 = arith.truncf %30 : vector<2x32xf32> to vector<2x32xbf16>
    %c0_20 = arith.constant 0 : index
    %c0_21 = arith.constant 0 : index
    %32 = vector.load %arg8[%c0_20, %c0_21] : memref<32x1024xbf16, #tpu.memory_space<vmem>>, vector<32x1024xbf16>
    %cst_22 = arith.constant dense<0.000000e+00> : vector<2x1024xf32>
    %33 = tpu.matmul %31, %32, %cst_22 {dimension_numbers = #tpu.dot_dimension_numbers<[1], [0], [0], [1], [0, 0, 1, 1], [], []>} : vector<2x32xbf16>, vector<32x1024xbf16>, vector<2x1024xf32> -> vector<2x1024xf32>
    %c0_23 = arith.constant 0 : index
    %c0_24 = arith.constant 0 : index
    %34 = vector.load %arg9[%c0_23, %c0_24] : memref<1x1024xf32, #tpu.memory_space<vmem>>, vector<1x1024xf32>
    %35 = vector.broadcast %34 : vector<1x1024xf32> to vector<2x1024xf32>
    %36 = arith.addf %33, %35 : vector<2x1024xf32>
    %37 = arith.negf %36 : vector<2x1024xf32>
    %38 = math.exp %37 : vector<2x1024xf32>
    %cst_25 = arith.constant 1.000000e+00 : f32
    %39 = vector.broadcast %cst_25 : f32 to vector<2x1024xf32>
    %40 = arith.addf %39, %38 : vector<2x1024xf32>
    %41 = arith.divf %39, %40 : vector<2x1024xf32>
    %c0_26 = arith.constant 0 : index
    %c0_27 = arith.constant 0 : index
    %42 = vector.load %arg11[%c0_26, %c0_27] : memref<2x1024xf32, #tpu.memory_space<vmem>>, vector<2x1024xf32>
    tpu.vector_store %arg11[%c0_26, %c0_27], %41 {strides = array<i32>} : memref<2x1024xf32, #tpu.memory_space<vmem>>, vector<2x1024xf32>,
    %c0_28 = arith.constant 0 : index
    %c0_29 = arith.constant 0 : index
    %43 = vector.load %arg12[%c0_28, %c0_29] : memref<2x16xf32, #tpu.memory_space<vmem>>, vector<2x16xf32>
    tpu.vector_store %arg12[%c0_28, %c0_29], %14 {strides = array<i32>} : memref<2x16xf32, #tpu.memory_space<vmem>>, vector<2x16xf32>,
    return
  }
  func.func @transform_0(%arg0: i32) -> (i32, i32) {
    %c0_i32 = arith.constant 0 : i32
    %c0_i32_0 = arith.constant 0 : i32
    return %arg0, %c0_i32 : i32, i32
  }
  func.func @transform_1(%arg0: i32) -> (i32, i32) {
    %c0_i32 = arith.constant 0 : i32
    %c0_i32_0 = arith.constant 0 : i32
    %c0_i32_1 = arith.constant 0 : i32
    return %c0_i32, %c0_i32_0 : i32, i32
  }
  func.func @transform_2(%arg0: i32) -> (i32, i32) {
    %c0_i32 = arith.constant 0 : i32
    %c0_i32_0 = arith.constant 0 : i32
    %c0_i32_1 = arith.constant 0 : i32
    return %c0_i32, %c0_i32_0 : i32, i32
  }
  func.func @transform_3(%arg0: i32) -> (i32, i32) {
    %c0_i32 = arith.constant 0 : i32
    %c0_i32_0 = arith.constant 0 : i32
    %c0_i32_1 = arith.constant 0 : i32
    return %c0_i32, %c0_i32_0 : i32, i32
  }
  func.func @transform_4(%arg0: i32) -> (i32, i32) {
    %c0_i32 = arith.constant 0 : i32
    %c0_i32_0 = arith.constant 0 : i32
    %c0_i32_1 = arith.constant 0 : i32
    return %c0_i32, %c0_i32_0 : i32, i32
  }
  func.func @transform_5(%arg0: i32) -> (i32, i32) {
    %c0_i32 = arith.constant 0 : i32
    %c0_i32_0 = arith.constant 0 : i32
    %c0_i32_1 = arith.constant 0 : i32
    return %c0_i32, %c0_i32_0 : i32, i32
  }
  func.func @transform_6(%arg0: i32) -> (i32, i32) {
    %c0_i32 = arith.constant 0 : i32
    %c0_i32_0 = arith.constant 0 : i32
    %c0_i32_1 = arith.constant 0 : i32
    return %c0_i32, %c0_i32_0 : i32, i32
  }
  func.func @transform_7(%arg0: i32) -> (i32, i32) {
    %c0_i32 = arith.constant 0 : i32
    %c0_i32_0 = arith.constant 0 : i32
    %c0_i32_1 = arith.constant 0 : i32
    return %c0_i32, %c0_i32_0 : i32, i32
  }
  func.func @transform_8(%arg0: i32) -> (i32, i32) {
    %c0_i32 = arith.constant 0 : i32
    %c0_i32_0 = arith.constant 0 : i32
    %c0_i32_1 = arith.constant 0 : i32
    return %c0_i32, %c0_i32_0 : i32, i32
  }
  func.func @transform_9(%arg0: i32) -> (i32, i32) {
    %c0_i32 = arith.constant 0 : i32
    %c0_i32_0 = arith.constant 0 : i32
    return %arg0, %c0_i32 : i32, i32
  }
  func.func @transform_10(%arg0: i32) -> (i32, i32) {
    %c0_i32 = arith.constant 0 : i32
    %c0_i32_0 = arith.constant 0 : i32
    return %arg0, %c0_i32 : i32, i32
  }
  func.func @transform_11(%arg0: i32) -> (i32, i32) {
    %c0_i32 = arith.constant 0 : i32
    %c0_i32_0 = arith.constant 0 : i32
    return %arg0, %c0_i32 : i32, i32
  }
}

</mosaic_0001>

<llo_original>
// kernel: vae_forward.1
$region0: #{vae_forward.1}
  #allocation0 [shape = 'u32[]', space=smem, size = 0x4, offset = 0x4, fixed_abs, tag = 'smem constant byte address 0x4 - core index']
  #allocation1 [shape = 'u32[144,128]{1,0:T(1,128)}', space=vmem, size = 0x12000, scoped, tag = 'internal scratch']
  %s0 = inlined_call_operand.vmem [shape: f32[2,1024], index: 0, kind: input, shape index: {}]
  %s1 = inlined_call_operand.vmem [shape: bf16[1024,32], index: 1, kind: input, shape index: {}]
  %s2 = inlined_call_operand.vmem [shape: f32[1,32], index: 2, kind: input, shape index: {}]
  %s3 = inlined_call_operand.vmem [shape: bf16[32,16], index: 3, kind: input, shape index: {}]
  %s4 = inlined_call_operand.vmem [shape: f32[1,16], index: 4, kind: input, shape index: {}]
  %s5 = inlined_call_operand.vmem [shape: bf16[8,32], index: 5, kind: input, shape index: {}]
  %s6 = inlined_call_operand.vmem [shape: f32[1,32], index: 6, kind: input, shape index: {}]
  %s7 = inlined_call_operand.vmem [shape: bf16[32,1024], index: 7, kind: input, shape index: {}]
  %s8 = inlined_call_operand.vmem [shape: f32[1,1024], index: 8, kind: input, shape index: {}]
  %s9 = inlined_call_operand.vmem [shape: f32[2,8], index: 9, kind: input, shape index: {}]
  %s10 = inlined_call_operand.vmem [shape: f32[2,1024], index: 10, kind: output, shape index: {0}]
  %s11 = inlined_call_operand.vmem [shape: f32[2,16], index: 11, kind: output, shape index: {1}]
  %12 = xla_tuple %s10, %s11
  %s13 = sld [smem:[#allocation0]]
  $region58: #{vae_forward.1} parent=0
    _
  %s15 = ssub.s32 1, %s13
  %s16 = scalar_select 0, %s15, %s13
  // Predicated region
  $region2: #{vae_forward.1} parent=0 // pred_check
    _
  $region3: #{vae_forward.1} parent=0 // pred_check_branch
    %18 = sbr.rel (0) target = $region5
  $region4: #{vae_forward.1} parent=0 // pred_region
    _
  $region5: #{vae_forward.1} parent=0 // pred_fallthru
    _
  // Predicated region
  $region6: #{vae_forward.1} parent=0 // pred_check
    _
  $region7: #{vae_forward.1} parent=0 // pred_check_branch
    %20 = sbr.rel (0) target = $region9
  $region8: #{vae_forward.1} parent=0 // pred_region
    _
  $region9: #{vae_forward.1} parent=0 // pred_fallthru
    _
  // Predicated region
  $region10: #{vae_forward.1} parent=0 // pred_check
    _
  $region11: #{vae_forward.1} parent=0 // pred_check_branch
    %22 = sbr.rel (0) target = $region13
  $region12: #{vae_forward.1} parent=0 // pred_region
    _
  $region13: #{vae_forward.1} parent=0 // pred_fallthru
    _
  // Predicated region
  $region14: #{vae_forward.1} parent=0 // pred_check
    _
  $region15: #{vae_forward.1} parent=0 // pred_check_branch
    %24 = sbr.rel (0) target = $region17
  $region16: #{vae_forward.1} parent=0 // pred_region
    _
  $region17: #{vae_forward.1} parent=0 // pred_fallthru
    _
  // Predicated region
  $region18: #{vae_forward.1} parent=0 // pred_check
    _
  $region19: #{vae_forward.1} parent=0 // pred_check_branch
    %26 = sbr.rel (0) target = $region21
  $region20: #{vae_forward.1} parent=0 // pred_region
    _
  $region21: #{vae_forward.1} parent=0 // pred_fallthru
    _
  // Predicated region
  $region22: #{vae_forward.1} parent=0 // pred_check
    _
  $region23: #{vae_forward.1} parent=0 // pred_check_branch
    %28 = sbr.rel (0) target = $region25
  $region24: #{vae_forward.1} parent=0 // pred_region
    _
  $region25: #{vae_forward.1} parent=0 // pred_fallthru
    _
  // Predicated region
  $region26: #{vae_forward.1} parent=0 // pred_check
    _
  $region27: #{vae_forward.1} parent=0 // pred_check_branch
    %30 = sbr.rel (0) target = $region29
  $region28: #{vae_forward.1} parent=0 // pred_region
    _
  $region29: #{vae_forward.1} parent=0 // pred_fallthru
    _
  // Predicated region
  $region30: #{vae_forward.1} parent=0 // pred_check
    _
  $region31: #{vae_forward.1} parent=0 // pred_check_branch
    %32 = sbr.rel (0) target = $region33
  $region32: #{vae_forward.1} parent=0 // pred_region
    _
  $region33: #{vae_forward.1} parent=0 // pred_fallthru
    _
  // Predicated region
  $region34: #{vae_forward.1} parent=0 // pred_check
    _
  $region35: #{vae_forward.1} parent=0 // pred_check_branch
    %34 = sbr.rel (0) target = $region37
  $region36: #{vae_forward.1} parent=0 // pred_region
    _
  $region37: #{vae_forward.1} parent=0 // pred_fallthru
    _
  // Predicated region
  $region38: #{vae_forward.1} parent=0 // pred_check
    _
  $region39: #{vae_forward.1} parent=0 // pred_check_branch
    %36 = sbr.rel (0) target = $region41
  $region40: #{vae_forward.1} parent=0 // pred_region
    _
  $region41: #{vae_forward.1} parent=0 // pred_fallthru
    _
  %v38 = vld [vmem:[%s0] sm:$0xff]
  %v39 = vld [vmem:[%s0 + $0x8] sm:$0xff]
  %v42 = vcombine.high %v38, %v38
  %v44 = vunpack.c.l.s4 1983009808
  %v45 = vunpack.c.0.s8 %v44
  %v46 = vlaneseq
  %v47 = vshrl.u32 %v46, 7
  %v48 = vsub.s32 %v45, %v47
  %v49 = vrot.slane %v38, %v48
  %v51 = vunpack.c.l.s4 1983009808
  %v52 = vunpack.c.0.s8 %v51
  %v53 = vlaneseq
  %v54 = vshrl.u32 %v53, 7
  %v55 = vsub.s32 %v52, %v54
  %v56 = vrot.slane %v42, %v55
  %v57 = vcombine.high %v49, %v49
  %v58 = vcombine.high %v56, %v56
  %v59 = vcombine.high %v39, %v39
  %v61 = vunpack.c.l.s4 1983009808
  %v62 = vunpack.c.0.s8 %v61
  %v63 = vlaneseq
  %v64 = vshrl.u32 %v63, 7
  %v65 = vsub.s32 %v62, %v64
  %v66 = vrot.slane %v39, %v65
  %v68 = vunpack.c.l.s4 1983009808
  %v69 = vunpack.c.0.s8 %v68
  %v70 = vlaneseq
  %v71 = vshrl.u32 %v70, 7
  %v72 = vsub.s32 %v69, %v71
  %v73 = vrot.slane %v59, %v72
  %v74 = vcombine.high %v66, %v66
  %v75 = vcombine.high %v73, %v73
  %v84 = vpack.c.bf16 %v49, %v49
  %v85 = vpack.c.bf16 %v57, %v57
  %v86 = vpack.c.bf16 %v56, %v56
  %v87 = vpack.c.bf16 %v58, %v58
  %v88 = vpack.c.bf16 %v66, %v66
  %v89 = vpack.c.bf16 %v74, %v74
  %v90 = vpack.c.bf16 %v73, %v73
  %v91 = vpack.c.bf16 %v75, %v75
  %v92 = vld [vmem:[%s1] sm:$0xf]
  %v93 = vld [vmem:[%s1 + $0x4] sm:$0xf]
  %v94 = vld [vmem:[%s1 + $0x8] sm:$0xf]
  %v95 = vld [vmem:[%s1 + $0xc] sm:$0xf]
  %v96 = vld [vmem:[%s1 + $0x10] sm:$0xf]
  %v97 = vld [vmem:[%s1 + $0x14] sm:$0xf]
  %v98 = vld [vmem:[%s1 + $0x18] sm:$0xf]
  %v99 = vld [vmem:[%s1 + $0x1c] sm:$0xf]
  %v100 = vld [vmem:[%s1 + $0x20] sm:$0xf]
  %v101 = vld [vmem:[%s1 + $0x24] sm:$0xf]
  %v102 = vld [vmem:[%s1 + $0x28] sm:$0xf]
  %v103 = vld [vmem:[%s1 + $0x2c] sm:$0xf]
  %v104 = vld [vmem:[%s1 + $0x30] sm:$0xf]
  %v105 = vld [vmem:[%s1 + $0x34] sm:$0xf]
  %v106 = vld [vmem:[%s1 + $0x38] sm:$0xf]
  %v107 = vld [vmem:[%s1 + $0x3c] sm:$0xf]
  %v108 = vld [vmem:[%s1 + $0x40] sm:$0xf]
  %v109 = vld [vmem:[%s1 + $0x44] sm:$0xf]
  %v110 = vld [vmem:[%s1 + $0x48] sm:$0xf]
  %v111 = vld [vmem:[%s1 + $0x4c] sm:$0xf]
  %v112 = vld [vmem:[%s1 + $0x50] sm:$0xf]
  %v113 = vld [vmem:[%s1 + $0x54] sm:$0xf]
  %v114 = vld [vmem:[%s1 + $0x58] sm:$0xf]
  %v115 = vld [vmem:[%s1 + $0x5c] sm:$0xf]
  %v116 = vld [vmem:[%s1 + $0x60] sm:$0xf]
  %v117 = vld [vmem:[%s1 + $0x64] sm:$0xf]
  %v118 = vld [vmem:[%s1 + $0x68] sm:$0xf]
  %v119 = vld [vmem:[%s1 + $0x6c] sm:$0xf]
  %v120 = vld [vmem:[%s1 + $0x70] sm:$0xf]
  %v121 = vld [vmem:[%s1 + $0x74] sm:$0xf]
  %v122 = vld [vmem:[%s1 + $0x78] sm:$0xf]
  %v123 = vld [vmem:[%s1 + $0x7c] sm:$0xf]
  %v124 = vld [vmem:[%s1 + $0x80] sm:$0xf]
  %v125 = vld [vmem:[%s1 + $0x84] sm:$0xf]
  %v126 = vld [vmem:[%s1 + $0x88] sm:$0xf]
  %v127 = vld [vmem:[%s1 + $0x8c] sm:$0xf]
  %v128 = vld [vmem:[%s1 + $0x90] sm:$0xf]
  %v129 = vld [vmem:[%s1 + $0x94] sm:$0xf]
  %v130 = vld [vmem:[%s1 + $0x98] sm:$0xf]
  %v131 = vld [vmem:[%s1 + $0x9c] sm:$0xf]
  %v132 = vld [vmem:[%s1 + $0xa0] sm:$0xf]
  %v133 = vld [vmem:[%s1 + $0xa4] sm:$0xf]
  %v134 = vld [vmem:[%s1 + $0xa8] sm:$0xf]
  %v135 = vld [vmem:[%s1 + $0xac] sm:$0xf]
  %v136 = vld [vmem:[%s1 + $0xb0] sm:$0xf]
  %v137 = vld [vmem:[%s1 + $0xb4] sm:$0xf]
  %v138 = vld [vmem:[%s1 + $0xb8] sm:$0xf]
  %v139 = vld [vmem:[%s1 + $0xbc] sm:$0xf]
  %v140 = vld [vmem:[%s1 + $0xc0] sm:$0xf]
  %v141 = vld [vmem:[%s1 + $0xc4] sm:$0xf]
  %v142 = vld [vmem:[%s1 + $0xc8] sm:$0xf]
  %v143 = vld [vmem:[%s1 + $0xcc] sm:$0xf]
  %v144 = vld [vmem:[%s1 + $0xd0] sm:$0xf]
  %v145 = vld [vmem:[%s1 + $0xd4] sm:$0xf]
  %v146 = vld [vmem:[%s1 + $0xd8] sm:$0xf]
  %v147 = vld [vmem:[%s1 + $0xdc] sm:$0xf]
  %v148 = vld [vmem:[%s1 + $0xe0] sm:$0xf]
  %v149 = vld [vmem:[%s1 + $0xe4] sm:$0xf]
  %v150 = vld [vmem:[%s1 + $0xe8] sm:$0xf]
  %v151 = vld [vmem:[%s1 + $0xec] sm:$0xf]
  %v152 = vld [vmem:[%s1 + $0xf0] sm:$0xf]
  %v153 = vld [vmem:[%s1 + $0xf4] sm:$0xf]
  %v154 = vld [vmem:[%s1 + $0xf8] sm:$0xf]
  %v155 = vld [vmem:[%s1 + $0xfc] sm:$0xf]
  %v156 = vld [vmem:[%s1 + $0x100] sm:$0xf]
  %v157 = vld [vmem:[%s1 + $0x104] sm:$0xf]
  %v158 = vld [vmem:[%s1 + $0x108] sm:$0xf]
  %v159 = vld [vmem:[%s1 + $0x10c] sm:$0xf]
  %v160 = vld [vmem:[%s1 + $0x110] sm:$0xf]
  %v161 = vld [vmem:[%s1 + $0x114] sm:$0xf]
  %v162 = vld [vmem:[%s1 + $0x118] sm:$0xf]
  %v163 = vld [vmem:[%s1 + $0x11c] sm:$0xf]
  %v164 = vld [vmem:[%s1 + $0x120] sm:$0xf]
  %v165 = vld [vmem:[%s1 + $0x124] sm:$0xf]
  %v166 = vld [vmem:[%s1 + $0x128] sm:$0xf]
  %v167 = vld [vmem:[%s1 + $0x12c] sm:$0xf]
  %v168 = vld [vmem:[%s1 + $0x130] sm:$0xf]
  %v169 = vld [vmem:[%s1 + $0x134] sm:$0xf]
  %v170 = vld [vmem:[%s1 + $0x138] sm:$0xf]
  %v171 = vld [vmem:[%s1 + $0x13c] sm:$0xf]
  %v172 = vld [vmem:[%s1 + $0x140] sm:$0xf]
  %v173 = vld [vmem:[%s1 + $0x144] sm:$0xf]
  %v174 = vld [vmem:[%s1 + $0x148] sm:$0xf]
  %v175 = vld [vmem:[%s1 + $0x14c] sm:$0xf]
  %v176 = vld [vmem:[%s1 + $0x150] sm:$0xf]
  %v177 = vld [vmem:[%s1 + $0x154] sm:$0xf]
  %v178 = vld [vmem:[%s1 + $0x158] sm:$0xf]
  %v179 = vld [vmem:[%s1 + $0x15c] sm:$0xf]
  %v180 = vld [vmem:[%s1 + $0x160] sm:$0xf]
  %v181 = vld [vmem:[%s1 + $0x164] sm:$0xf]
  %v182 = vld [vmem:[%s1 + $0x168] sm:$0xf]
  %v183 = vld [vmem:[%s1 + $0x16c] sm:$0xf]
  %v184 = vld [vmem:[%s1 + $0x170] sm:$0xf]
  %v185 = vld [vmem:[%s1 + $0x174] sm:$0xf]
  %v186 = vld [vmem:[%s1 + $0x178] sm:$0xf]
  %v187 = vld [vmem:[%s1 + $0x17c] sm:$0xf]
  %v188 = vld [vmem:[%s1 + $0x180] sm:$0xf]
  %v189 = vld [vmem:[%s1 + $0x184] sm:$0xf]
  %v190 = vld [vmem:[%s1 + $0x188] sm:$0xf]
  %v191 = vld [vmem:[%s1 + $0x18c] sm:$0xf]
  %v192 = vld [vmem:[%s1 + $0x190] sm:$0xf]
  %v193 = vld [vmem:[%s1 + $0x194] sm:$0xf]
  %v194 = vld [vmem:[%s1 + $0x198] sm:$0xf]
  %v195 = vld [vmem:[%s1 + $0x19c] sm:$0xf]
  %v196 = vld [vmem:[%s1 + $0x1a0] sm:$0xf]
  %v197 = vld [vmem:[%s1 + $0x1a4] sm:$0xf]
  %v198 = vld [vmem:[%s1 + $0x1a8] sm:$0xf]
  %v199 = vld [vmem:[%s1 + $0x1ac] sm:$0xf]
  %v200 = vld [vmem:[%s1 + $0x1b0] sm:$0xf]
  %v201 = vld [vmem:[%s1 + $0x1b4] sm:$0xf]
  %v202 = vld [vmem:[%s1 + $0x1b8] sm:$0xf]
  %v203 = vld [vmem:[%s1 + $0x1bc] sm:$0xf]
  %v204 = vld [vmem:[%s1 + $0x1c0] sm:$0xf]
  %v205 = vld [vmem:[%s1 + $0x1c4] sm:$0xf]
  %v206 = vld [vmem:[%s1 + $0x1c8] sm:$0xf]
  %v207 = vld [vmem:[%s1 + $0x1cc] sm:$0xf]
  %v208 = vld [vmem:[%s1 + $0x1d0] sm:$0xf]
  %v209 = vld [vmem:[%s1 + $0x1d4] sm:$0xf]
  %v210 = vld [vmem:[%s1 + $0x1d8] sm:$0xf]
  %v211 = vld [vmem:[%s1 + $0x1dc] sm:$0xf]
  %v212 = vld [vmem:[%s1 + $0x1e0] sm:$0xf]
  %v213 = vld [vmem:[%s1 + $0x1e4] sm:$0xf]
  %v214 = vld [vmem:[%s1 + $0x1e8] sm:$0xf]
  %v215 = vld [vmem:[%s1 + $0x1ec] sm:$0xf]
  %v216 = vld [vmem:[%s1 + $0x1f0] sm:$0xf]
  %v217 = vld [vmem:[%s1 + $0x1f4] sm:$0xf]
  %v218 = vld [vmem:[%s1 + $0x1f8] sm:$0xf]
  %v219 = vld [vmem:[%s1 + $0x1fc] sm:$0xf]
  %v220 = vld [vmem:[%s2] sm:$0x1]
  %v222 = vlaneseq
  %v223 = vshrl.u32 %v222, 7
  %v224 = vsub.s32 0, %v223
  %v225 = vrot.slane %v220, %v224
  %v355 = vunpack.c.l.b16 %v92
  %v356 = vunpack.c.l.b16 %v93
  %v357 = vunpack.c.l.b16 %v94
  %v358 = vunpack.c.l.b16 %v95
  %v359 = vunpack.c.l.b16 %v96
  %v360 = vunpack.c.l.b16 %v97
  %v361 = vunpack.c.l.b16 %v98
  %v362 = vunpack.c.l.b16 %v99
  %v363 = vunpack.c.l.b16 %v100
  %v364 = vunpack.c.l.b16 %v101
  %v365 = vunpack.c.l.b16 %v102
  %v366 = vunpack.c.l.b16 %v103
  %v367 = vunpack.c.l.b16 %v104
  %v368 = vunpack.c.l.b16 %v105
  %v369 = vunpack.c.l.b16 %v106
  %v370 = vunpack.c.l.b16 %v107
  %v371 = vunpack.c.l.b16 %v108
  %v372 = vunpack.c.l.b16 %v109
  %v373 = vunpack.c.l.b16 %v110
  %v374 = vunpack.c.l.b16 %v111
  %v375 = vunpack.c.l.b16 %v112
  %v376 = vunpack.c.l.b16 %v113
  %v377 = vunpack.c.l.b16 %v114
  %v378 = vunpack.c.l.b16 %v115
  %v379 = vunpack.c.l.b16 %v116
  %v380 = vunpack.c.l.b16 %v117
  %v381 = vunpack.c.l.b16 %v118
  %v382 = vunpack.c.l.b16 %v119
  %v383 = vunpack.c.l.b16 %v120
  %v384 = vunpack.c.l.b16 %v121
  %v385 = vunpack.c.l.b16 %v122
  %v386 = vunpack.c.l.b16 %v123
  %v387 = vunpack.c.l.b16 %v124
  %v388 = vunpack.c.l.b16 %v125
  %v389 = vunpack.c.l.b16 %v126
  %v390 = vunpack.c.l.b16 %v127
  %v391 = vunpack.c.l.b16 %v128
  %v392 = vunpack.c.l.b16 %v129
  %v393 = vunpack.c.l.b16 %v130
  %v394 = vunpack.c.l.b16 %v131
  %v395 = vunpack.c.l.b16 %v132
  %v396 = vunpack.c.l.b16 %v133
  %v397 = vunpack.c.l.b16 %v134
  %v398 = vunpack.c.l.b16 %v135
  %v399 = vunpack.c.l.b16 %v136
  %v400 = vunpack.c.l.b16 %v137
  %v401 = vunpack.c.l.b16 %v138
  %v402 = vunpack.c.l.b16 %v139
  %v403 = vunpack.c.l.b16 %v140
  %v404 = vunpack.c.l.b16 %v141
  %v405 = vunpack.c.l.b16 %v142
  %v406 = vunpack.c.l.b16 %v143
  %v407 = vunpack.c.l.b16 %v144
  %v408 = vunpack.c.l.b16 %v145
  %v409 = vunpack.c.l.b16 %v146
  %v410 = vunpack.c.l.b16 %v147
  %v411 = vunpack.c.l.b16 %v148
  %v412 = vunpack.c.l.b16 %v149
  %v413 = vunpack.c.l.b16 %v150
  %v414 = vunpack.c.l.b16 %v151
  %v415 = vunpack.c.l.b16 %v152
  %v416 = vunpack.c.l.b16 %v153
  %v417 = vunpack.c.l.b16 %v154
  %v418 = vunpack.c.l.b16 %v155
  %v419 = vunpack.c.l.b16 %v156
  %v420 = vunpack.c.l.b16 %v157
  %v421 = vunpack.c.l.b16 %v158
  %v422 = vunpack.c.l.b16 %v159
  %v423 = vunpack.c.l.b16 %v160
  %v424 = vunpack.c.l.b16 %v161
  %v425 = vunpack.c.l.b16 %v162
  %v426 = vunpack.c.l.b16 %v163
  %v427 = vunpack.c.l.b16 %v164
  %v428 = vunpack.c.l.b16 %v165
  %v429 = vunpack.c.l.b16 %v166
  %v430 = vunpack.c.l.b16 %v167
  %v431 = vunpack.c.l.b16 %v168
  %v432 = vunpack.c.l.b16 %v169
  %v433 = vunpack.c.l.b16 %v170
  %v434 = vunpack.c.l.b16 %v171
  %v435 = vunpack.c.l.b16 %v172
  %v436 = vunpack.c.l.b16 %v173
  %v437 = vunpack.c.l.b16 %v174
  %v438 = vunpack.c.l.b16 %v175
  %v439 = vunpack.c.l.b16 %v176
  %v440 = vunpack.c.l.b16 %v177
  %v441 = vunpack.c.l.b16 %v178
  %v442 = vunpack.c.l.b16 %v179
  %v443 = vunpack.c.l.b16 %v180
  %v444 = vunpack.c.l.b16 %v181
  %v445 = vunpack.c.l.b16 %v182
  %v446 = vunpack.c.l.b16 %v183
  %v447 = vunpack.c.l.b16 %v184
  %v448 = vunpack.c.l.b16 %v185
  %v449 = vunpack.c.l.b16 %v186
  %v450 = vunpack.c.l.b16 %v187
  %v451 = vunpack.c.l.b16 %v188
  %v452 = vunpack.c.l.b16 %v189
  %v453 = vunpack.c.l.b16 %v190
  %v454 = vunpack.c.l.b16 %v191
  %v455 = vunpack.c.l.b16 %v192
  %v456 = vunpack.c.l.b16 %v193
  %v457 = vunpack.c.l.b16 %v194
  %v458 = vunpack.c.l.b16 %v195
  %v459 = vunpack.c.l.b16 %v196
  %v460 = vunpack.c.l.b16 %v197
  %v461 = vunpack.c.l.b16 %v198
  %v462 = vunpack.c.l.b16 %v199
  %v463 = vunpack.c.l.b16 %v200
  %v464 = vunpack.c.l.b16 %v201
  %v465 = vunpack.c.l.b16 %v202
  %v466 = vunpack.c.l.b16 %v203
  %v467 = vunpack.c.l.b16 %v204
  %v468 = vunpack.c.l.b16 %v205
  %v469 = vunpack.c.l.b16 %v206
  %v470 = vunpack.c.l.b16 %v207
  %v471 = vunpack.c.l.b16 %v208
  %v472 = vunpack.c.l.b16 %v209
  %v473 = vunpack.c.l.b16 %v210
  %v474 = vunpack.c.l.b16 %v211
  %v475 = vunpack.c.l.b16 %v212
  %v476 = vunpack.c.l.b16 %v213
  %v477 = vunpack.c.l.b16 %v214
  %v478 = vunpack.c.l.b16 %v215
  %v479 = vunpack.c.l.b16 %v216
  %v480 = vunpack.c.l.b16 %v217
  %v481 = vunpack.c.l.b16 %v218
  %v482 = vunpack.c.l.b16 %v219
  %v483 = vpack.c.b16 %v356, %v355
  %v484 = vpack.c.b16 %v358, %v357
  %v485 = vpack.c.b16 %v360, %v359
  %v486 = vpack.c.b16 %v362, %v361
  %v487 = vpack.c.b16 %v364, %v363
  %v488 = vpack.c.b16 %v366, %v365
  %v489 = vpack.c.b16 %v368, %v367
  %v490 = vpack.c.b16 %v370, %v369
  %v491 = vpack.c.b16 %v372, %v371
  %v492 = vpack.c.b16 %v374, %v373
  %v493 = vpack.c.b16 %v376, %v375
  %v494 = vpack.c.b16 %v378, %v377
  %v495 = vpack.c.b16 %v380, %v379
  %v496 = vpack.c.b16 %v382, %v381
  %v497 = vpack.c.b16 %v384, %v383
  %v498 = vpack.c.b16 %v386, %v385
  %v499 = vpack.c.b16 %v388, %v387
  %v500 = vpack.c.b16 %v390, %v389
  %v501 = vpack.c.b16 %v392, %v391
  %v502 = vpack.c.b16 %v394, %v393
  %v503 = vpack.c.b16 %v396, %v395
  %v504 = vpack.c.b16 %v398, %v397
  %v505 = vpack.c.b16 %v400, %v399
  %v506 = vpack.c.b16 %v402, %v401
  %v507 = vpack.c.b16 %v404, %v403
  %v508 = vpack.c.b16 %v406, %v405
  %v509 = vpack.c.b16 %v408, %v407
  %v510 = vpack.c.b16 %v410, %v409
  %v511 = vpack.c.b16 %v412, %v411
  %v512 = vpack.c.b16 %v414, %v413
  %v513 = vpack.c.b16 %v416, %v415
  %v514 = vpack.c.b16 %v418, %v417
  %v515 = vpack.c.b16 %v420, %v419
  %v516 = vpack.c.b16 %v422, %v421
  %v517 = vpack.c.b16 %v424, %v423
  %v518 = vpack.c.b16 %v426, %v425
  %v519 = vpack.c.b16 %v428, %v427
  %v520 = vpack.c.b16 %v430, %v429
  %v521 = vpack.c.b16 %v432, %v431
  %v522 = vpack.c.b16 %v434, %v433
  %v523 = vpack.c.b16 %v436, %v435
  %v524 = vpack.c.b16 %v438, %v437
  %v525 = vpack.c.b16 %v440, %v439
  %v526 = vpack.c.b16 %v442, %v441
  %v527 = vpack.c.b16 %v444, %v443
  %v528 = vpack.c.b16 %v446, %v445
  %v529 = vpack.c.b16 %v448, %v447
  %v530 = vpack.c.b16 %v450, %v449
  %v531 = vpack.c.b16 %v452, %v451
  %v532 = vpack.c.b16 %v454, %v453
  %v533 = vpack.c.b16 %v456, %v455
  %v534 = vpack.c.b16 %v458, %v457
  %v535 = vpack.c.b16 %v460, %v459
  %v536 = vpack.c.b16 %v462, %v461
  %v537 = vpack.c.b16 %v464, %v463
  %v538 = vpack.c.b16 %v466, %v465
  %v539 = vpack.c.b16 %v468, %v467
  %v540 = vpack.c.b16 %v470, %v469
  %v541 = vpack.c.b16 %v472, %v471
  %v542 = vpack.c.b16 %v474, %v473
  %v543 = vpack.c.b16 %v476, %v475
  %v544 = vpack.c.b16 %v478, %v477
  %v545 = vpack.c.b16 %v480, %v479
  %v546 = vpack.c.b16 %v482, %v481
  %611 = vmatprep.subr.bf16.mxu0 0
  %612 = vmatpush1.bf16.msra.mxu0 %v490
  %613 = vmatprep.subr.bf16.mxu0 0
  %614 = vmatpush1.bf16.msra.mxu0 %v489
  %615 = vmatprep.subr.bf16.mxu0 0
  %616 = vmatpush1.bf16.msra.mxu0 %v488
  %617 = vmatprep.subr.bf16.mxu0 0
  %618 = vmatpush1.bf16.msra.mxu0 %v487
  %619 = vmatprep.subr.bf16.mxu0 0
  %620 = vmatpush1.bf16.msra.mxu0 %v486
  %621 = vmatprep.subr.bf16.mxu0 0
  %622 = vmatpush1.bf16.msra.mxu0 %v485
  %623 = vmatprep.subr.bf16.mxu0 0
  %624 = vmatpush1.bf16.msra.mxu0 %v484
  %625 = vmatprep.subr.bf16.mxu0 0
  %626 = vmatpush1.bf16.msra.mxu0 %v483
  %627 = vmatprep.subr.bf16.mxu0 0
  %628 = vmatpush2.bf16.msra.mxu0 %v498
  %629 = vmatprep.subr.bf16.mxu0 0
  %630 = vmatpush2.bf16.msra.mxu0 %v497
  %631 = vmatprep.subr.bf16.mxu0 0
  %632 = vmatpush2.bf16.msra.mxu0 %v496
  %633 = vmatprep.subr.bf16.mxu0 0
  %634 = vmatpush2.bf16.msra.mxu0 %v495
  %635 = vmatprep.subr.bf16.mxu0 0
  %636 = vmatpush2.bf16.msra.mxu0 %v494
  %637 = vmatprep.subr.bf16.mxu0 0
  %638 = vmatpush2.bf16.msra.mxu0 %v493
  %639 = vmatprep.subr.bf16.mxu0 0
  %640 = vmatpush2.bf16.msra.mxu0 %v492
  %641 = vmatprep.subr.bf16.mxu0 0
  %642 = vmatpush2.bf16.msra.mxu0 %v491
  %643 = vmatprep.mubr.bf16.mxu0 %v85
  %644 = vmatmul.mubr.bf16.gmra.mxu0 %v84
  %v645 = vpop.f32.mrf.mxu0
  %v646 = vadd.f32 %v225, %v645
  %v647 = vpop.f32.mrf.mxu0
  %v648 = vpop.f32.mrf.mxu0
  %v649 = vpop.f32.mrf.mxu0
  %650 = vdwg.mxu0
  %651 = vmatprep.subr.bf16.mxu0 0
  %652 = vmatpush1.bf16.msra.mxu0 %v506
  %653 = vmatprep.subr.bf16.mxu0 0
  %654 = vmatpush1.bf16.msra.mxu0 %v505
  %655 = vmatprep.subr.bf16.mxu0 0
  %656 = vmatpush1.bf16.msra.mxu0 %v504
  %657 = vmatprep.subr.bf16.mxu0 0
  %658 = vmatpush1.bf16.msra.mxu0 %v503
  %659 = vmatprep.subr.bf16.mxu0 0
  %660 = vmatpush1.bf16.msra.mxu0 %v502
  %661 = vmatprep.subr.bf16.mxu0 0
  %662 = vmatpush1.bf16.msra.mxu0 %v501
  %663 = vmatprep.subr.bf16.mxu0 0
  %664 = vmatpush1.bf16.msra.mxu0 %v500
  %665 = vmatprep.subr.bf16.mxu0 0
  %666 = vmatpush1.bf16.msra.mxu0 %v499
  %667 = vmatprep.subr.bf16.mxu0 0
  %668 = vmatpush2.bf16.msra.mxu0 %v514
  %669 = vmatprep.subr.bf16.mxu0 0
  %670 = vmatpush2.bf16.msra.mxu0 %v513
  %671 = vmatprep.subr.bf16.mxu0 0
  %672 = vmatpush2.bf16.msra.mxu0 %v512
  %673 = vmatprep.subr.bf16.mxu0 0
  %674 = vmatpush2.bf16.msra.mxu0 %v511
  %675 = vmatprep.subr.bf16.mxu0 0
  %676 = vmatpush2.bf16.msra.mxu0 %v510
  %677 = vmatprep.subr.bf16.mxu0 0
  %678 = vmatpush2.bf16.msra.mxu0 %v509
  %679 = vmatprep.subr.bf16.mxu0 0
  %680 = vmatpush2.bf16.msra.mxu0 %v508
  %681 = vmatprep.subr.bf16.mxu0 0
  %682 = vmatpush2.bf16.msra.mxu0 %v507
  %683 = vmatprep.mubr.bf16.mxu0 %v87
  %684 = vmatmul.mubr.bf16.gmra.mxu0 %v86
  %v685 = vpop.f32.mrf.mxu0
  %v686 = vadd.f32 %v646, %v685
  %v687 = vpop.f32.mrf.mxu0
  %v688 = vpop.f32.mrf.mxu0
  %v689 = vpop.f32.mrf.mxu0
  %690 = vdwg.mxu0
  %691 = vmatprep.subr.bf16.mxu0 0
  %692 = vmatpush1.bf16.msra.mxu0 %v522
  %693 = vmatprep.subr.bf16.mxu0 0
  %694 = vmatpush1.bf16.msra.mxu0 %v521
  %695 = vmatprep.subr.bf16.mxu0 0
  %696 = vmatpush1.bf16.msra.mxu0 %v520
  %697 = vmatprep.subr.bf16.mxu0 0
  %698 = vmatpush1.bf16.msra.mxu0 %v519
  %699 = vmatprep.subr.bf16.mxu0 0
  %700 = vmatpush1.bf16.msra.mxu0 %v518
  %701 = vmatprep.subr.bf16.mxu0 0
  %702 = vmatpush1.bf16.msra.mxu0 %v517
  %703 = vmatprep.subr.bf16.mxu0 0
  %704 = vmatpush1.bf16.msra.mxu0 %v516
  %705 = vmatprep.subr.bf16.mxu0 0
  %706 = vmatpush1.bf16.msra.mxu0 %v515
  %707 = vmatprep.subr.bf16.mxu0 0
  %708 = vmatpush2.bf16.msra.mxu0 %v530
  %709 = vmatprep.subr.bf16.mxu0 0
  %710 = vmatpush2.bf16.msra.mxu0 %v529
  %711 = vmatprep.subr.bf16.mxu0 0
  %712 = vmatpush2.bf16.msra.mxu0 %v528
  %713 = vmatprep.subr.bf16.mxu0 0
  %714 = vmatpush2.bf16.msra.mxu0 %v527
  %715 = vmatprep.subr.bf16.mxu0 0
  %716 = vmatpush2.bf16.msra.mxu0 %v526
  %717 = vmatprep.subr.bf16.mxu0 0
  %718 = vmatpush2.bf16.msra.mxu0 %v525
  %719 = vmatprep.subr.bf16.mxu0 0
  %720 = vmatpush2.bf16.msra.mxu0 %v524
  %721 = vmatprep.subr.bf16.mxu0 0
  %722 = vmatpush2.bf16.msra.mxu0 %v523
  %723 = vmatprep.mubr.bf16.mxu0 %v89
  %724 = vmatmul.mubr.bf16.gmra.mxu0 %v88
  %v725 = vpop.f32.mrf.mxu0
  %v726 = vadd.f32 %v686, %v725
  %v727 = vpop.f32.mrf.mxu0
  %v728 = vpop.f32.mrf.mxu0
  %v729 = vpop.f32.mrf.mxu0
  %730 = vdwg.mxu0
  %731 = vmatprep.subr.bf16.mxu0 0
  %732 = vmatpush1.bf16.msra.mxu0 %v538
  %733 = vmatprep.subr.bf16.mxu0 0
  %734 = vmatpush1.bf16.msra.mxu0 %v537
  %735 = vmatprep.subr.bf16.mxu0 0
  %736 = vmatpush1.bf16.msra.mxu0 %v536
  %737 = vmatprep.subr.bf16.mxu0 0
  %738 = vmatpush1.bf16.msra.mxu0 %v535
  %739 = vmatprep.subr.bf16.mxu0 0
  %740 = vmatpush1.bf16.msra.mxu0 %v534
  %741 = vmatprep.subr.bf16.mxu0 0
  %742 = vmatpush1.bf16.msra.mxu0 %v533
  %743 = vmatprep.subr.bf16.mxu0 0
  %744 = vmatpush1.bf16.msra.mxu0 %v532
  %745 = vmatprep.subr.bf16.mxu0 0
  %746 = vmatpush1.bf16.msra.mxu0 %v531
  %747 = vmatprep.subr.bf16.mxu0 0
  %748 = vmatpush2.bf16.msra.mxu0 %v546
  %749 = vmatprep.subr.bf16.mxu0 0
  %750 = vmatpush2.bf16.msra.mxu0 %v545
  %751 = vmatprep.subr.bf16.mxu0 0
  %752 = vmatpush2.bf16.msra.mxu0 %v544
  %753 = vmatprep.subr.bf16.mxu0 0
  %754 = vmatpush2.bf16.msra.mxu0 %v543
  %755 = vmatprep.subr.bf16.mxu0 0
  %756 = vmatpush2.bf16.msra.mxu0 %v542
  %757 = vmatprep.subr.bf16.mxu0 0
  %758 = vmatpush2.bf16.msra.mxu0 %v541
  %759 = vmatprep.subr.bf16.mxu0 0
  %760 = vmatpush2.bf16.msra.mxu0 %v540
  %761 = vmatprep.subr.bf16.mxu0 0
  %762 = vmatpush2.bf16.msra.mxu0 %v539
  %763 = vmatprep.mubr.bf16.mxu0 %v91
  %764 = vmatmul.mubr.bf16.gmra.mxu0 %v90
  %v765 = vpop.f32.mrf.mxu0
  %v766 = vadd.f32 %v726, %v765
  %v767 = vpop.f32.mrf.mxu0
  %v768 = vpop.f32.mrf.mxu0
  %v769 = vpop.f32.mrf.mxu0
  %770 = vdwg.mxu0
  %v771 = vmax.f32 %v766, 0.0
  %v772 = vpack.c.bf16 %v771, %v771
  %v773 = vld [vmem:[%s3] sm:$0xf]
  %v774 = vld [vmem:[%s3 + $0x4] sm:$0xf]
  %v775 = vld [vmem:[%s3 + $0x8] sm:$0xf]
  %v776 = vld [vmem:[%s3 + $0xc] sm:$0xf]
  %v777 = vld [vmem:[%s4] sm:$0x1]
  %v779 = vlaneseq
  %v780 = vshrl.u32 %v779, 7
  %v781 = vsub.s32 0, %v780
  %v782 = vrot.slane %v777, %v781
  %v788 = vunpack.c.l.b16 %v773
  %v789 = vunpack.c.l.b16 %v774
  %v790 = vunpack.c.l.b16 %v775
  %v791 = vunpack.c.l.b16 %v776
  %v792 = vpack.c.b16 %v789, %v788
  %v793 = vpack.c.b16 %v791, %v790
  %vm796 = vcmask 261120
  %v798 = vsel %vm796, %v772, 0
  %800 = vmatprep.subr.bf16.mxu0 0
  %801 = vmatpush1.bf16.msra.mxu0 0
  %802 = vmatprep.subr.bf16.mxu0 0
  %803 = vmatpush1.bf16.msra.mxu0 0
  %804 = vmatprep.subr.bf16.mxu0 0
  %805 = vmatpush1.bf16.msra.mxu0 0
  %806 = vmatprep.subr.bf16.mxu0 0
  %807 = vmatpush1.bf16.msra.mxu0 0
  %808 = vmatprep.subr.bf16.mxu0 0
  %809 = vmatpush1.bf16.msra.mxu0 0
  %810 = vmatprep.subr.bf16.mxu0 0
  %811 = vmatpush1.bf16.msra.mxu0 0
  %812 = vmatprep.subr.bf16.mxu0 0
  %813 = vmatpush1.bf16.msra.mxu0 %v793
  %814 = vmatprep.subr.bf16.mxu0 0
  %815 = vmatpush1.bf16.msra.mxu0 %v792
  %816 = vmatprep.subr.bf16.mxu0 0
  %817 = vmatpush2.bf16.msra.mxu0 0
  %818 = vmatprep.subr.bf16.mxu0 0
  %819 = vmatpush2.bf16.msra.mxu0 0
  %820 = vmatprep.subr.bf16.mxu0 0
  %821 = vmatpush2.bf16.msra.mxu0 0
  %822 = vmatprep.subr.bf16.mxu0 0
  %823 = vmatpush2.bf16.msra.mxu0 0
  %824 = vmatprep.subr.bf16.mxu0 0
  %825 = vmatpush2.bf16.msra.mxu0 0
  %826 = vmatprep.subr.bf16.mxu0 0
  %827 = vmatpush2.bf16.msra.mxu0 0
  %828 = vmatprep.subr.bf16.mxu0 0
  %829 = vmatpush2.bf16.msra.mxu0 0
  %830 = vmatprep.subr.bf16.mxu0 0
  %831 = vmatpush2.bf16.msra.mxu0 0
  %832 = vmatprep.mubr.bf16.mxu0 0
  %833 = vmatmul.mubr.bf16.gmra.mxu0 %v798
  %v834 = vpop.f32.mrf.mxu0
  %v835 = vadd.f32 %v782, %v834
  %v836 = vpop.f32.mrf.mxu0
  %v837 = vpop.f32.mrf.mxu0
  %v838 = vpop.f32.mrf.mxu0
  %839 = vdwg.mxu0
  %v840 = vmul.f32 %v835, 0.5
  %v841 = vmul.f32 %v840, 1.442695
  %v842 = vpow.pop %v841
  %v843 = vld [vmem:[%s9] sm:$0x3]
  %845 = vrot.lane.b32.xlu0 %v842, 120
  %v846 = vpop.permute.xlu0 %845
  %v848 = vmul.f32 %v843, %v846
  %v849 = vadd.f32 %v848, %v835
  %v850 = vpack.c.bf16 %v849, %v849
  %v851 = vld [vmem:[%s5] sm:$0xf]
  %v852 = vld [vmem:[%s6] sm:$0x1]
  %v854 = vlaneseq
  %v855 = vshrl.u32 %v854, 7
  %v856 = vsub.s32 0, %v855
  %v857 = vrot.slane %v852, %v856
  %vm859 = vcmask 64512
  %v861 = vsel %vm859, %v850, 0
  %vm863 = vcmask 1043456
  %v865 = vsel %vm863, %v851, 0
  %867 = vmatprep.subr.bf16.mxu0 0
  %868 = vmatpush1.bf16.msra.mxu0 0
  %869 = vmatprep.subr.bf16.mxu0 0
  %870 = vmatpush1.bf16.msra.mxu0 0
  %871 = vmatprep.subr.bf16.mxu0 0
  %872 = vmatpush1.bf16.msra.mxu0 0
  %873 = vmatprep.subr.bf16.mxu0 0
  %874 = vmatpush1.bf16.msra.mxu0 0
  %875 = vmatprep.subr.bf16.mxu0 0
  %876 = vmatpush1.bf16.msra.mxu0 0
  %877 = vmatprep.subr.bf16.mxu0 0
  %878 = vmatpush1.bf16.msra.mxu0 0
  %879 = vmatprep.subr.bf16.mxu0 0
  %880 = vmatpush1.bf16.msra.mxu0 0
  %881 = vmatprep.subr.bf16.mxu0 0
  %882 = vmatpush1.bf16.msra.mxu0 %v865
  %883 = vmatprep.subr.bf16.mxu0 0
  %884 = vmatpush2.bf16.msra.mxu0 0
  %885 = vmatprep.subr.bf16.mxu0 0
  %886 = vmatpush2.bf16.msra.mxu0 0
  %887 = vmatprep.subr.bf16.mxu0 0
  %888 = vmatpush2.bf16.msra.mxu0 0
  %889 = vmatprep.subr.bf16.mxu0 0
  %890 = vmatpush2.bf16.msra.mxu0 0
  %891 = vmatprep.subr.bf16.mxu0 0
  %892 = vmatpush2.bf16.msra.mxu0 0
  %893 = vmatprep.subr.bf16.mxu0 0
  %894 = vmatpush2.bf16.msra.mxu0 0
  %895 = vmatprep.subr.bf16.mxu0 0
  %896 = vmatpush2.bf16.msra.mxu0 0
  %897 = vmatprep.subr.bf16.mxu0 0
  %898 = vmatpush2.bf16.msra.mxu0 0
  %899 = vmatprep.mubr.bf16.mxu0 0
  %900 = vmatmul.mubr.bf16.gmra.mxu0 %v861
  %v901 = vpop.f32.mrf.mxu0
  %v902 = vadd.f32 %v857, %v901
  %v903 = vpop.f32.mrf.mxu0
  %v904 = vpop.f32.mrf.mxu0
  %v905 = vpop.f32.mrf.mxu0
  %906 = vdwg.mxu0
  %v907 = vmax.f32 %v902, 0.0
  %v908 = vpack.c.bf16 %v907, %v907
  %v909 = vld [vmem:[%s7] sm:$0xff]
  %v910 = vld [vmem:[%s7 + $0x8] sm:$0xff]
  %v911 = vld [vmem:[%s7 + $0x10] sm:$0xff]
  %v912 = vld [vmem:[%s7 + $0x18] sm:$0xff]
  %v913 = vld [vmem:[%s7 + $0x20] sm:$0xff]
  %v914 = vld [vmem:[%s7 + $0x28] sm:$0xff]
  %v915 = vld [vmem:[%s7 + $0x30] sm:$0xff]
  %v916 = vld [vmem:[%s7 + $0x38] sm:$0xff]
  %v917 = vld [vmem:[%s7 + $0x40] sm:$0xff]
  %v918 = vld [vmem:[%s7 + $0x48] sm:$0xff]
  %v919 = vld [vmem:[%s7 + $0x50] sm:$0xff]
  %v920 = vld [vmem:[%s7 + $0x58] sm:$0xff]
  %v921 = vld [vmem:[%s7 + $0x60] sm:$0xff]
  %v922 = vld [vmem:[%s7 + $0x68] sm:$0xff]
  %v923 = vld [vmem:[%s7 + $0x70] sm:$0xff]
  %v924 = vld [vmem:[%s7 + $0x78] sm:$0xff]
  %v925 = vld [vmem:[%s8] sm:$0xff]
  %v927 = vlaneseq
  %v928 = vshrl.u32 %v927, 7
  %v929 = vsub.s32 0, %v928
  %v930 = vrot.slane %v925, %v929
  %v931 = vlaneseq
  %v932 = vshrl.u32 %v931, 7
  %v933 = vsub.s32 1, %v932
  %v934 = vrot.slane %v925, %v933
  %v935 = vlaneseq
  %v936 = vshrl.u32 %v935, 7
  %v937 = vsub.s32 2, %v936
  %v938 = vrot.slane %v925, %v937
  %v939 = vlaneseq
  %v940 = vshrl.u32 %v939, 7
  %v941 = vsub.s32 3, %v940
  %v942 = vrot.slane %v925, %v941
  %v943 = vlaneseq
  %v944 = vshrl.u32 %v943, 7
  %v945 = vsub.s32 4, %v944
  %v946 = vrot.slane %v925, %v945
  %v947 = vlaneseq
  %v948 = vshrl.u32 %v947, 7
  %v949 = vsub.s32 5, %v948
  %v950 = vrot.slane %v925, %v949
  %v951 = vlaneseq
  %v952 = vshrl.u32 %v951, 7
  %v953 = vsub.s32 6, %v952
  %v954 = vrot.slane %v925, %v953
  %v955 = vlaneseq
  %v956 = vshrl.u32 %v955, 7
  %v957 = vsub.s32 7, %v956
  %v958 = vrot.slane %v925, %v957
  %v983 = vunpack.c.l.b16 %v909
  %v984 = vunpack.c.h.b16 %v909
  %v985 = vunpack.c.l.b16 %v910
  %v986 = vunpack.c.h.b16 %v910
  %v987 = vunpack.c.l.b16 %v911
  %v988 = vunpack.c.h.b16 %v911
  %v989 = vunpack.c.l.b16 %v912
  %v990 = vunpack.c.h.b16 %v912
  %v991 = vunpack.c.l.b16 %v913
  %v992 = vunpack.c.h.b16 %v913
  %v993 = vunpack.c.l.b16 %v914
  %v994 = vunpack.c.h.b16 %v914
  %v995 = vunpack.c.l.b16 %v915
  %v996 = vunpack.c.h.b16 %v915
  %v997 = vunpack.c.l.b16 %v916
  %v998 = vunpack.c.h.b16 %v916
  %v999 = vunpack.c.l.b16 %v917
  %v1000 = vunpack.c.h.b16 %v917
  %v1001 = vunpack.c.l.b16 %v918
  %v1002 = vunpack.c.h.b16 %v918
  %v1003 = vunpack.c.l.b16 %v919
  %v1004 = vunpack.c.h.b16 %v919
  %v1005 = vunpack.c.l.b16 %v920
  %v1006 = vunpack.c.h.b16 %v920
  %v1007 = vunpack.c.l.b16 %v921
  %v1008 = vunpack.c.h.b16 %v921
  %v1009 = vunpack.c.l.b16 %v922
  %v1010 = vunpack.c.h.b16 %v922
  %v1011 = vunpack.c.l.b16 %v923
  %v1012 = vunpack.c.h.b16 %v923
  %v1013 = vunpack.c.l.b16 %v924
  %v1014 = vunpack.c.h.b16 %v924
  %v1015 = vpack.c.b16 %v991, %v983
  %v1016 = vpack.c.b16 %v992, %v984
  %v1017 = vpack.c.b16 %v993, %v985
  %v1018 = vpack.c.b16 %v994, %v986
  %v1019 = vpack.c.b16 %v995, %v987
  %v1020 = vpack.c.b16 %v996, %v988
  %v1021 = vpack.c.b16 %v997, %v989
  %v1022 = vpack.c.b16 %v998, %v990
  %v1023 = vpack.c.b16 %v1007, %v999
  %v1024 = vpack.c.b16 %v1008, %v1000
  %v1025 = vpack.c.b16 %v1009, %v1001
  %v1026 = vpack.c.b16 %v1010, %v1002
  %v1027 = vpack.c.b16 %v1011, %v1003
  %v1028 = vpack.c.b16 %v1012, %v1004
  %v1029 = vpack.c.b16 %v1013, %v1005
  %v1030 = vpack.c.b16 %v1014, %v1006
  %v1048 = vsel %vm796, %v908, 0
  %1050 = vmatprep.subr.bf16.mxu0 0
  %1051 = vmatpush1.bf16.msra.mxu0 0
  %1052 = vmatprep.subr.bf16.mxu0 0
  %1053 = vmatpush1.bf16.msra.mxu0 0
  %1054 = vmatprep.subr.bf16.mxu0 0
  %1055 = vmatpush1.bf16.msra.mxu0 0
  %1056 = vmatprep.subr.bf16.mxu0 0
  %1057 = vmatpush1.bf16.msra.mxu0 0
  %1058 = vmatprep.subr.bf16.mxu0 0
  %1059 = vmatpush1.bf16.msra.mxu0 0
  %1060 = vmatprep.subr.bf16.mxu0 0
  %1061 = vmatpush1.bf16.msra.mxu0 0
  %1062 = vmatprep.subr.bf16.mxu0 %v1024
  %1063 = vmatpush1.bf16.msra.mxu0 %v1023
  %1064 = vmatprep.subr.bf16.mxu0 %v1016
  %1065 = vmatpush1.bf16.msra.mxu0 %v1015
  %1066 = vmatprep.subr.bf16.mxu0 0
  %1067 = vmatpush2.bf16.msra.mxu0 0
  %1068 = vmatprep.subr.bf16.mxu0 0
  %1069 = vmatpush2.bf16.msra.mxu0 0
  %1070 = vmatprep.subr.bf16.mxu0 0
  %1071 = vmatpush2.bf16.msra.mxu0 0
  %1072 = vmatprep.subr.bf16.mxu0 0
  %1073 = vmatpush2.bf16.msra.mxu0 0
  %1074 = vmatprep.subr.bf16.mxu0 0
  %1075 = vmatpush2.bf16.msra.mxu0 0
  %1076 = vmatprep.subr.bf16.mxu0 0
  %1077 = vmatpush2.bf16.msra.mxu0 0
  %1078 = vmatprep.subr.bf16.mxu0 0
  %1079 = vmatpush2.bf16.msra.mxu0 0
  %1080 = vmatprep.subr.bf16.mxu0 0
  %1081 = vmatpush2.bf16.msra.mxu0 0
  %1082 = vmatprep.mubr.bf16.mxu0 0
  %1083 = vmatmul.mubr.bf16.gmra.mxu0 %v1048
  %v1084 = vpop.f32.mrf.mxu0
  %v1085 = vadd.f32 %v930, %v1084
  %v1086 = vpop.f32.mrf.mxu0
  %v1087 = vadd.f32 %v934, %v1086
  %v1088 = vpop.f32.mrf.mxu0
  %v1089 = vpop.f32.mrf.mxu0
  %1090 = vdwg.mxu0
  %1091 = vmatprep.subr.bf16.mxu0 0
  %1092 = vmatpush1.bf16.msra.mxu0 0
  %1093 = vmatprep.subr.bf16.mxu0 0
  %1094 = vmatpush1.bf16.msra.mxu0 0
  %1095 = vmatprep.subr.bf16.mxu0 0
  %1096 = vmatpush1.bf16.msra.mxu0 0
  %1097 = vmatprep.subr.bf16.mxu0 0
  %1098 = vmatpush1.bf16.msra.mxu0 0
  %1099 = vmatprep.subr.bf16.mxu0 0
  %1100 = vmatpush1.bf16.msra.mxu0 0
  %1101 = vmatprep.subr.bf16.mxu0 0
  %1102 = vmatpush1.bf16.msra.mxu0 0
  %1103 = vmatprep.subr.bf16.mxu0 %v1026
  %1104 = vmatpush1.bf16.msra.mxu0 %v1025
  %1105 = vmatprep.subr.bf16.mxu0 %v1018
  %1106 = vmatpush1.bf16.msra.mxu0 %v1017
  %1107 = vmatprep.subr.bf16.mxu0 0
  %1108 = vmatpush2.bf16.msra.mxu0 0
  %1109 = vmatprep.subr.bf16.mxu0 0
  %1110 = vmatpush2.bf16.msra.mxu0 0
  %1111 = vmatprep.subr.bf16.mxu0 0
  %1112 = vmatpush2.bf16.msra.mxu0 0
  %1113 = vmatprep.subr.bf16.mxu0 0
  %1114 = vmatpush2.bf16.msra.mxu0 0
  %1115 = vmatprep.subr.bf16.mxu0 0
  %1116 = vmatpush2.bf16.msra.mxu0 0
  %1117 = vmatprep.subr.bf16.mxu0 0
  %1118 = vmatpush2.bf16.msra.mxu0 0
  %1119 = vmatprep.subr.bf16.mxu0 0
  %1120 = vmatpush2.bf16.msra.mxu0 0
  %1121 = vmatprep.subr.bf16.mxu0 0
  %1122 = vmatpush2.bf16.msra.mxu0 0
  %1123 = vmatprep.mubr.bf16.mxu0 0
  %1124 = vmatmul.mubr.bf16.gmra.mxu0 %v1048
  %v1125 = vpop.f32.mrf.mxu0
  %v1126 = vadd.f32 %v938, %v1125
  %v1127 = vpop.f32.mrf.mxu0
  %v1128 = vadd.f32 %v942, %v1127
  %v1129 = vpop.f32.mrf.mxu0
  %v1130 = vpop.f32.mrf.mxu0
  %1131 = vdwg.mxu0
  %1132 = vmatprep.subr.bf16.mxu0 0
  %1133 = vmatpush1.bf16.msra.mxu0 0
  %1134 = vmatprep.subr.bf16.mxu0 0
  %1135 = vmatpush1.bf16.msra.mxu0 0
  %1136 = vmatprep.subr.bf16.mxu0 0
  %1137 = vmatpush1.bf16.msra.mxu0 0
  %1138 = vmatprep.subr.bf16.mxu0 0
  %1139 = vmatpush1.bf16.msra.mxu0 0
  %1140 = vmatprep.subr.bf16.mxu0 0
  %1141 = vmatpush1.bf16.msra.mxu0 0
  %1142 = vmatprep.subr.bf16.mxu0 0
  %1143 = vmatpush1.bf16.msra.mxu0 0
  %1144 = vmatprep.subr.bf16.mxu0 %v1028
  %1145 = vmatpush1.bf16.msra.mxu0 %v1027
  %1146 = vmatprep.subr.bf16.mxu0 %v1020
  %1147 = vmatpush1.bf16.msra.mxu0 %v1019
  %1148 = vmatprep.subr.bf16.mxu0 0
  %1149 = vmatpush2.bf16.msra.mxu0 0
  %1150 = vmatprep.subr.bf16.mxu0 0
  %1151 = vmatpush2.bf16.msra.mxu0 0
  %1152 = vmatprep.subr.bf16.mxu0 0
  %1153 = vmatpush2.bf16.msra.mxu0 0
  %1154 = vmatprep.subr.bf16.mxu0 0
  %1155 = vmatpush2.bf16.msra.mxu0 0
  %1156 = vmatprep.subr.bf16.mxu0 0
  %1157 = vmatpush2.bf16.msra.mxu0 0
  %1158 = vmatprep.subr.bf16.mxu0 0
  %1159 = vmatpush2.bf16.msra.mxu0 0
  %1160 = vmatprep.subr.bf16.mxu0 0
  %1161 = vmatpush2.bf16.msra.mxu0 0
  %1162 = vmatprep.subr.bf16.mxu0 0
  %1163 = vmatpush2.bf16.msra.mxu0 0
  %1164 = vmatprep.mubr.bf16.mxu0 0
  %1165 = vmatmul.mubr.bf16.gmra.mxu0 %v1048
  %v1166 = vpop.f32.mrf.mxu0
  %v1167 = vadd.f32 %v946, %v1166
  %v1168 = vpop.f32.mrf.mxu0
  %v1169 = vadd.f32 %v950, %v1168
  %v1170 = vpop.f32.mrf.mxu0
  %v1171 = vpop.f32.mrf.mxu0
  %1172 = vdwg.mxu0
  %1173 = vmatprep.subr.bf16.mxu0 0
  %1174 = vmatpush1.bf16.msra.mxu0 0
  %1175 = vmatprep.subr.bf16.mxu0 0
  %1176 = vmatpush1.bf16.msra.mxu0 0
  %1177 = vmatprep.subr.bf16.mxu0 0
  %1178 = vmatpush1.bf16.msra.mxu0 0
  %1179 = vmatprep.subr.bf16.mxu0 0
  %1180 = vmatpush1.bf16.msra.mxu0 0
  %1181 = vmatprep.subr.bf16.mxu0 0
  %1182 = vmatpush1.bf16.msra.mxu0 0
  %1183 = vmatprep.subr.bf16.mxu0 0
  %1184 = vmatpush1.bf16.msra.mxu0 0
  %1185 = vmatprep.subr.bf16.mxu0 %v1030
  %1186 = vmatpush1.bf16.msra.mxu0 %v1029
  %1187 = vmatprep.subr.bf16.mxu0 %v1022
  %1188 = vmatpush1.bf16.msra.mxu0 %v1021
  %1189 = vmatprep.subr.bf16.mxu0 0
  %1190 = vmatpush2.bf16.msra.mxu0 0
  %1191 = vmatprep.subr.bf16.mxu0 0
  %1192 = vmatpush2.bf16.msra.mxu0 0
  %1193 = vmatprep.subr.bf16.mxu0 0
  %1194 = vmatpush2.bf16.msra.mxu0 0
  %1195 = vmatprep.subr.bf16.mxu0 0
  %1196 = vmatpush2.bf16.msra.mxu0 0
  %1197 = vmatprep.subr.bf16.mxu0 0
  %1198 = vmatpush2.bf16.msra.mxu0 0
  %1199 = vmatprep.subr.bf16.mxu0 0
  %1200 = vmatpush2.bf16.msra.mxu0 0
  %1201 = vmatprep.subr.bf16.mxu0 0
  %1202 = vmatpush2.bf16.msra.mxu0 0
  %1203 = vmatprep.subr.bf16.mxu0 0
  %1204 = vmatpush2.bf16.msra.mxu0 0
  %1205 = vmatprep.mubr.bf16.mxu0 0
  %1206 = vmatmul.mubr.bf16.gmra.mxu0 %v1048
  %v1207 = vpop.f32.mrf.mxu0
  %v1208 = vadd.f32 %v954, %v1207
  %v1209 = vpop.f32.mrf.mxu0
  %v1210 = vadd.f32 %v958, %v1209
  %v1211 = vpop.f32.mrf.mxu0
  %v1212 = vpop.f32.mrf.mxu0
  %1213 = vdwg.mxu0
  %v1214 = vxor.u32 %v1085, 2147483648
  %v1215 = vxor.u32 %v1087, 2147483648
  %v1216 = vxor.u32 %v1126, 2147483648
  %v1217 = vxor.u32 %v1128, 2147483648
  %v1218 = vxor.u32 %v1167, 2147483648
  %v1219 = vxor.u32 %v1169, 2147483648
  %v1220 = vxor.u32 %v1208, 2147483648
  %v1221 = vxor.u32 %v1210, 2147483648
  %v1222 = vmul.f32 %v1214, 1.442695
  %v1223 = vpow.pop %v1222
  %v1224 = vmul.f32 %v1215, 1.442695
  %v1225 = vpow.pop %v1224
  %v1226 = vmul.f32 %v1216, 1.442695
  %v1227 = vpow.pop %v1226
  %v1228 = vmul.f32 %v1217, 1.442695
  %v1229 = vpow.pop %v1228
  %v1230 = vmul.f32 %v1218, 1.442695
  %v1231 = vpow.pop %v1230
  %v1232 = vmul.f32 %v1219, 1.442695
  %v1233 = vpow.pop %v1232
  %v1234 = vmul.f32 %v1220, 1.442695
  %v1235 = vpow.pop %v1234
  %v1236 = vmul.f32 %v1221, 1.442695
  %v1237 = vpow.pop %v1236
  %v1238 = vadd.f32 %v1223, 1.0
  %v1239 = vadd.f32 %v1225, 1.0
  %v1240 = vadd.f32 %v1227, 1.0
  %v1241 = vadd.f32 %v1229, 1.0
  %v1242 = vadd.f32 %v1231, 1.0
  %v1243 = vadd.f32 %v1233, 1.0
  %v1244 = vadd.f32 %v1235, 1.0
  %v1245 = vadd.f32 %v1237, 1.0
  %v1246 = vrcp.pop %v1238
  %v1247 = vmul.f32 1.0, %v1246
  %v1248 = vrcp.pop %v1239
  %v1249 = vmul.f32 1.0, %v1248
  %v1250 = vrcp.pop %v1240
  %v1251 = vmul.f32 1.0, %v1250
  %v1252 = vrcp.pop %v1241
  %v1253 = vmul.f32 1.0, %v1252
  %v1254 = vrcp.pop %v1242
  %v1255 = vmul.f32 1.0, %v1254
  %v1256 = vrcp.pop %v1243
  %v1257 = vmul.f32 1.0, %v1256
  %v1258 = vrcp.pop %v1244
  %v1259 = vmul.f32 1.0, %v1258
  %v1260 = vrcp.pop %v1245
  %v1261 = vmul.f32 1.0, %v1260
  %v1270 = vcombine.low %v1247, %v1249
  %v1271 = vcombine.low %v1251, %v1253
  %v1273 = vunpack.c.l.s4 1983009808
  %v1274 = vunpack.c.0.s8 %v1273
  %v1275 = vlaneseq
  %v1276 = vshrl.u32 %v1275, 7
  %v1277 = vsub.s32 %v1274, %v1276
  %v1278 = vrot.slane %v1270, %v1277
  %v1280 = vunpack.c.l.s4 1983009808
  %v1281 = vunpack.c.0.s8 %v1280
  %v1282 = vlaneseq
  %v1283 = vshrl.u32 %v1282, 7
  %v1284 = vsub.s32 %v1281, %v1283
  %v1285 = vrot.slane %v1271, %v1284
  %v1286 = vcombine.low %v1278, %v1285
  %v1287 = vcombine.low %v1255, %v1257
  %v1288 = vcombine.low %v1259, %v1261
  %v1290 = vunpack.c.l.s4 1983009808
  %v1291 = vunpack.c.0.s8 %v1290
  %v1292 = vlaneseq
  %v1293 = vshrl.u32 %v1292, 7
  %v1294 = vsub.s32 %v1291, %v1293
  %v1295 = vrot.slane %v1287, %v1294
  %v1297 = vunpack.c.l.s4 1983009808
  %v1298 = vunpack.c.0.s8 %v1297
  %v1299 = vlaneseq
  %v1300 = vshrl.u32 %v1299, 7
  %v1301 = vsub.s32 %v1298, %v1300
  %v1302 = vrot.slane %v1288, %v1301
  %v1303 = vcombine.low %v1295, %v1302
  %1306 = vst [vmem:[%s10] sm:$0xff] %v1286
  %1307 = vst [vmem:[%s10 + $0x8] sm:$0xff] %v1303
  %vm1308 = vcmask 123904
  %1309 = vst.msk [vmem:[%s11] sm:$0x3] %vm1308, %v835
  // Predicated region
  $region42: #{vae_forward.1} parent=0 // pred_check
    _
  $region43: #{vae_forward.1} parent=0 // pred_check_branch
    %1311 = sbr.rel (0) target = $region45
  $region44: #{vae_forward.1} parent=0 // pred_region
    _
  $region45: #{vae_forward.1} parent=0 // pred_fallthru
    _
  // Predicated region
  $region46: #{vae_forward.1} parent=0 // pred_check
    _
  $region47: #{vae_forward.1} parent=0 // pred_check_branch
    %1313 = sbr.rel (0) target = $region49
  $region48: #{vae_forward.1} parent=0 // pred_region
    _
  $region49: #{vae_forward.1} parent=0 // pred_fallthru
    _
  // Predicated region
  $region50: #{vae_forward.1} parent=0 // pred_check
    _
  $region51: #{vae_forward.1} parent=0 // pred_check_branch
    %1315 = sbr.rel (0) target = $region53
  $region52: #{vae_forward.1} parent=0 // pred_region
    _
  $region53: #{vae_forward.1} parent=0 // pred_fallthru
    _
  // Predicated region
  $region54: #{vae_forward.1} parent=0 // pred_check
    _
  $region55: #{vae_forward.1} parent=0 // pred_check_branch
    %1317 = sbr.rel (0) target = $region57
  $region56: #{vae_forward.1} parent=0 // pred_region
    _
  $region57: #{vae_forward.1} parent=0 // pred_fallthru
    _

</llo_original>
